<compile_context>
chip_gen: v6e
topology: v6e:2x2x1
jax: 0.10.0
libtpu: 0.0.40
codegen_flags: <defaults>
</compile_context>

<pallas_src>
import functools

import jax
import jax.numpy as jnp
from jax.experimental import pallas as pl
from jax.experimental.pallas import tpu as pltpu


def _elu(h):
    # ELU(alpha=1): h if h > 0 else expm1(h).
    # expm1 is computed via the cancellation-free identity
    #     expm1(z) = tanh(z/2) * (exp(z) + 1)
    # which avoids the exp(h)-1 cancellation near 0 while only using
    # primitives (exp, tanh) that are guaranteed to lower on TPU Pallas.
    z = jnp.minimum(h, 0.0)                       # clamp: no inf on untaken branch
    neg = jnp.tanh(0.5 * z) * (jnp.exp(z) + 1.0)  # == expm1(z), cancellation-free
    return jnp.where(h > 0, h, neg)


def _mlp_kernel(x_ref, w1_ref, b1_ref, w3_ref, b3_ref, o_ref):
    # fc1: [TB, D_in] @ [D_in, H] + [1, H], then ELU
    h = jnp.dot(x_ref[...], w1_ref[...], preferred_element_type=jnp.float32)
    h = _elu(h + b1_ref[...])
    # fc3: [TB, H] @ [H, A] + [1, A]
    out = jnp.dot(h, w3_ref[...], preferred_element_type=jnp.float32)
    o_ref[...] = (out + b3_ref[...]).astype(o_ref.dtype)


def prepare_mlp_params(w1, b1, w3, b3):
    """One-time layout prep (call OUTSIDE the per-step hot loop).

    Converts PyTorch-layout params (weights [out, in], biases 1-D) into the
    kernel layout: weights [in, out], biases [1, out].
    """
    return dict(
        w1=jnp.asarray(w1).T,                  # [D_in, H]
        b1=jnp.asarray(b1).reshape(1, -1),     # [1, H]
        w3=jnp.asarray(w3).T,                  # [H, A]
        b3=jnp.asarray(b3).reshape(1, -1),     # [1, A]
    )


def _pick_batch_tile(batch, max_tile):
    """Largest multiple-of-8 divisor of `batch` that is <= max_tile (or None)."""
    best = None
    t = 8
    while t <= min(batch, max_tile):
        if batch % t == 0:
            best = t
        t += 8
    return best


@functools.partial(jax.jit, static_argnames=("max_batch_tile",))
def mlp_network_forward(x, params, max_batch_tile=1024):
    """Fused MLP forward.  x: [B, input_dims] f32 -> [B, n_actions] f32."""
    w1, b1, w3, b3 = params["w1"], params["b1"], params["w3"], params["b3"]
    B, D_in = x.shape
    H = w1.shape[1]
    A = w3.shape[1]
    out_shape = jax.ShapeDtypeStruct((B, A), x.dtype)

    tb = None if B <= max_batch_tile else _pick_batch_tile(B, max_batch_tile)

    if tb is None:
        # Small (or awkwardly sized) batch: single gridless invocation.
        # Whole problem lives in VMEM; no grid-step loop scaffolding.
        return pl.pallas_call(_mlp_kernel, out_shape=out_shape)(x, w1, b1, w3, b3)

    # Large batch: tile the batch axis.  Activations stream through VMEM
    # (double-buffered by the BlockSpec pipeline) while weights/biases stay
    # resident (constant index maps); "parallel" lets the batch axis shard
    # across TensorCores (v7x has 2 TCs).
    return pl.pallas_call(
        _mlp_kernel,
        out_shape=out_shape,
        grid=(B // tb,),
        in_specs=[
            pl.BlockSpec((tb, D_in), lambda i: (i, 0)),   # x tile
            pl.BlockSpec((D_in, H), lambda i: (0, 0)),    # w1 (resident)
            pl.BlockSpec((1, H), lambda i: (0, 0)),       # b1 (resident)
            pl.BlockSpec((H, A), lambda i: (0, 0)),       # w3 (resident)
            pl.BlockSpec((1, A), lambda i: (0, 0)),       # b3 (resident)
        ],
        out_specs=pl.BlockSpec((tb, A), lambda i: (i, 0)),
        compiler_params=pltpu.CompilerParams(
            dimension_semantics=("parallel",),
        ),
    )(x, w1, b1, w3, b3)


def _init_linear(key, out_features, in_features):
    """Deterministic init mimicking nn.Linear default (uniform +/- 1/sqrt(fan_in))."""
    kw, kb = jax.random.split(key)
    bound = 1.0 / jnp.sqrt(jnp.float32(in_features))
    w = jax.random.uniform(kw, (out_features, in_features), jnp.float32,
                           minval=-bound, maxval=bound)
    b = jax.random.uniform(kb, (out_features,), jnp.float32,
                           minval=-bound, maxval=bound)
    return w, b


def _reference_forward(x, w1, b1, w3, b3):
    h = jnp.dot(x, w1.T, precision=jax.lax.Precision.HIGHEST) + b1
    h = jnp.where(h > 0, h, jnp.expm1(h))
    return jnp.dot(h, w3.T, precision=jax.lax.Precision.HIGHEST) + b3


if __name__ == "__main__":
    # Small shapes consistent with the module: input_dims, fc1_dims, n_actions.
    input_dims, fc1_dims, n_actions = 16, 32, 4

    key = jax.random.PRNGKey(0)
    k_xs, k_xl, k1, k3 = jax.random.split(key, 4)

    w1, b1 = _init_linear(k1, fc1_dims, input_dims)
    w3, b3 = _init_linear(k3, n_actions, fc1_dims)
    params = prepare_mlp_params(w1, b1, w3, b3)   # one-time layout prep

    # Small batch -> gridless single-shot path.
    x_small = jax.random.normal(k_xs, (8, input_dims), jnp.float32)
    out_small = jax.block_until_ready(mlp_network_forward(x_small, params))

    # Larger batch -> batch-tiled "parallel" path (grid=(2,), 512-row tiles).
    x_large = jax.random.normal(k_xl, (1024, input_dims), jnp.float32)
    out_large = jax.block_until_ready(
        mlp_network_forward(x_large, params, max_batch_tile=512))

    for x_in, out in ((x_small, out_small), (x_large, out_large)):
        ref = _reference_forward(x_in, w1, b1, w3, b3)
        assert out.shape == ref.shape
        err = float(jnp.max(jnp.abs(out - ref)))
        assert jnp.allclose(out, ref, atol=2e-5, rtol=2e-5), f"max abs err {err}"

    print("KERNEL_OK")
</pallas_src>

<mosaic_0001>
module attributes {stable_mosaic.version = 11 : i64} {
  func.func @_mlp_kernel(%arg0: memref<8x16xf32, #tpu.memory_space<vmem>>, %arg1: memref<16x32xf32, #tpu.memory_space<vmem>>, %arg2: memref<1x32xf32, #tpu.memory_space<vmem>>, %arg3: memref<32x4xf32, #tpu.memory_space<vmem>>, %arg4: memref<1x4xf32, #tpu.memory_space<vmem>>, %arg5: memref<8x4xf32, #tpu.memory_space<vmem>>) attributes {dimension_semantics = [], scalar_prefetch = 0 : i64, scratch_operands = 0 : i64, tpu.core_type = #tpu.core_type<tc>} {
    %c0 = arith.constant 0 : index
    %c0_0 = arith.constant 0 : index
    %0 = vector.load %arg0[%c0, %c0_0] : memref<8x16xf32, #tpu.memory_space<vmem>>, vector<8x16xf32>
    %c0_1 = arith.constant 0 : index
    %c0_2 = arith.constant 0 : index
    %1 = vector.load %arg1[%c0_1, %c0_2] : memref<16x32xf32, #tpu.memory_space<vmem>>, vector<16x32xf32>
    %cst = arith.constant dense<0.000000e+00> : vector<8x32xf32>
    %2 = tpu.matmul %0, %1, %cst {dimension_numbers = #tpu.dot_dimension_numbers<[1], [0], [0], [1], [0, 0, 1, 1], [], []>} : vector<8x16xf32>, vector<16x32xf32>, vector<8x32xf32> -> vector<8x32xf32>
    %c0_3 = arith.constant 0 : index
    %c0_4 = arith.constant 0 : index
    %3 = vector.load %arg2[%c0_3, %c0_4] : memref<1x32xf32, #tpu.memory_space<vmem>>, vector<1x32xf32>
    %4 = vector.broadcast %3 : vector<1x32xf32> to vector<8x32xf32>
    %5 = arith.addf %2, %4 : vector<8x32xf32>
    %cst_5 = arith.constant 0.000000e+00 : f32
    %6 = vector.broadcast %cst_5 : f32 to vector<8x32xf32>
    %7 = arith.minimumf %5, %6 : vector<8x32xf32>
    %cst_6 = arith.constant 5.000000e-01 : f32
    %8 = vector.broadcast %cst_6 : f32 to vector<8x32xf32>
    %9 = arith.mulf %8, %7 : vector<8x32xf32>
    %10 = math.tanh %9 : vector<8x32xf32>
    %11 = math.exp %7 : vector<8x32xf32>
    %cst_7 = arith.constant 1.000000e+00 : f32
    %12 = vector.broadcast %cst_7 : f32 to vector<8x32xf32>
    %13 = arith.addf %11, %12 : vector<8x32xf32>
    %14 = arith.mulf %10, %13 : vector<8x32xf32>
    %cst_8 = arith.constant 0.000000e+00 : f32
    %15 = vector.broadcast %cst_8 : f32 to vector<8x32xf32>
    %16 = arith.cmpf ogt, %5, %15 : vector<8x32xf32>
    %17 = arith.select %16, %5, %14 : vector<8x32xi1>, vector<8x32xf32>
    %c0_9 = arith.constant 0 : index
    %c0_10 = arith.constant 0 : index
    %18 = vector.load %arg3[%c0_9, %c0_10] : memref<32x4xf32, #tpu.memory_space<vmem>>, vector<32x4xf32>
    %cst_11 = arith.constant dense<0.000000e+00> : vector<8x4xf32>
    %19 = tpu.matmul %17, %18, %cst_11 {dimension_numbers = #tpu.dot_dimension_numbers<[1], [0], [0], [1], [0, 0, 1, 1], [], []>} : vector<8x32xf32>, vector<32x4xf32>, vector<8x4xf32> -> vector<8x4xf32>
    %c0_12 = arith.constant 0 : index
    %c0_13 = arith.constant 0 : index
    %20 = vector.load %arg4[%c0_12, %c0_13] : memref<1x4xf32, #tpu.memory_space<vmem>>, vector<1x4xf32>
    %21 = vector.broadcast %20 : vector<1x4xf32> to vector<8x4xf32>
    %22 = arith.addf %19, %21 : vector<8x4xf32>
    %c0_14 = arith.constant 0 : index
    %c0_15 = arith.constant 0 : index
    %23 = vector.load %arg5[%c0_14, %c0_15] : memref<8x4xf32, #tpu.memory_space<vmem>>, vector<8x4xf32>
    tpu.vector_store %arg5[%c0_14, %c0_15], %22 {strides = array<i32>} : memref<8x4xf32, #tpu.memory_space<vmem>>, vector<8x4xf32>,
    return
  }
}

</mosaic_0001>

<llo_original>
// kernel: mlp_network_forward.1
$region0: #{mlp_network_forward.1}
  #allocation0 [shape = 'u32[]', space=smem, size = 0x4, offset = 0x4, fixed_abs, tag = 'smem constant byte address 0x4 - core index']
  #allocation1 [shape = 'u32[144,128]{1,0:T(1,128)}', space=vmem, size = 0x12000, scoped, tag = 'internal scratch']
  %s0 = inlined_call_operand.vmem [shape: f32[8,16], index: 0, kind: input, shape index: {}]
  %s1 = inlined_call_operand.vmem [shape: f32[16,32], index: 1, kind: input, shape index: {}]
  %s2 = inlined_call_operand.vmem [shape: f32[1,32], index: 2, kind: input, shape index: {}]
  %s3 = inlined_call_operand.vmem [shape: f32[32,4], index: 3, kind: input, shape index: {}]
  %s4 = inlined_call_operand.vmem [shape: f32[1,4], index: 4, kind: input, shape index: {}]
  %s5 = inlined_call_operand.vmem [shape: f32[8,4], index: 5, kind: output, shape index: {}]
  %s6 = sld [smem:[#allocation0]]
  $region30: #{mlp_network_forward.1} parent=0
    _
  %s8 = ssub.s32 1, %s6
  %s9 = scalar_select 0, %s8, %s6
  // Predicated region
  $region2: #{mlp_network_forward.1} parent=0 // pred_check
    _
  $region3: #{mlp_network_forward.1} parent=0 // pred_check_branch
    %11 = sbr.rel (0) target = $region5
  $region4: #{mlp_network_forward.1} parent=0 // pred_region
    _
  $region5: #{mlp_network_forward.1} parent=0 // pred_fallthru
    _
  // Predicated region
  $region6: #{mlp_network_forward.1} parent=0 // pred_check
    _
  $region7: #{mlp_network_forward.1} parent=0 // pred_check_branch
    %13 = sbr.rel (0) target = $region9
  $region8: #{mlp_network_forward.1} parent=0 // pred_region
    _
  $region9: #{mlp_network_forward.1} parent=0 // pred_fallthru
    _
  // Predicated region
  $region10: #{mlp_network_forward.1} parent=0 // pred_check
    _
  $region11: #{mlp_network_forward.1} parent=0 // pred_check_branch
    %15 = sbr.rel (0) target = $region13
  $region12: #{mlp_network_forward.1} parent=0 // pred_region
    _
  $region13: #{mlp_network_forward.1} parent=0 // pred_fallthru
    _
  // Predicated region
  $region14: #{mlp_network_forward.1} parent=0 // pred_check
    _
  $region15: #{mlp_network_forward.1} parent=0 // pred_check_branch
    %17 = sbr.rel (0) target = $region17
  $region16: #{mlp_network_forward.1} parent=0 // pred_region
    _
  $region17: #{mlp_network_forward.1} parent=0 // pred_fallthru
    _
  // Predicated region
  $region18: #{mlp_network_forward.1} parent=0 // pred_check
    _
  $region19: #{mlp_network_forward.1} parent=0 // pred_check_branch
    %19 = sbr.rel (0) target = $region21
  $region20: #{mlp_network_forward.1} parent=0 // pred_region
    _
  $region21: #{mlp_network_forward.1} parent=0 // pred_fallthru
    _
  %v20 = vld [vmem:[%s0] sm:$0xff]
  %v21 = vld [vmem:[%s1] sm:$0xff]
  %v22 = vld [vmem:[%s1 + $0x8] sm:$0xff]
  %v23 = vld [vmem:[%s2] sm:$0x1]
  %v25 = vlaneseq
  %v26 = vshrl.u32 %v25, 7
  %v27 = vsub.s32 0, %v26
  %v28 = vrot.slane %v23, %v27
  %vm30 = vcmask 130048
  %v32 = vsel %vm30, %v20, 0
  %34 = vmatprep.subr.mxu0 0.0
  %35 = vmatpush1.msra.mxu0 0.0
  %36 = vmatprep.subr.mxu0 0.0
  %37 = vmatpush1.msra.mxu0 0.0
  %38 = vmatprep.subr.mxu0 0.0
  %39 = vmatpush1.msra.mxu0 0.0
  %40 = vmatprep.subr.mxu0 0.0
  %41 = vmatpush1.msra.mxu0 0.0
  %42 = vmatprep.subr.mxu0 0.0
  %43 = vmatpush1.msra.mxu0 0.0
  %44 = vmatprep.subr.mxu0 0.0
  %45 = vmatpush1.msra.mxu0 0.0
  %46 = vmatprep.subr.mxu0 0.0
  %47 = vmatpush1.msra.mxu0 0.0
  %48 = vmatprep.subr.mxu0 0.0
  %49 = vmatpush1.msra.mxu0 0.0
  %50 = vmatprep.subr.mxu0 0.0
  %51 = vmatpush1.msra.mxu0 0.0
  %52 = vmatprep.subr.mxu0 0.0
  %53 = vmatpush1.msra.mxu0 0.0
  %54 = vmatprep.subr.mxu0 0.0
  %55 = vmatpush1.msra.mxu0 0.0
  %56 = vmatprep.subr.mxu0 0.0
  %57 = vmatpush1.msra.mxu0 0.0
  %58 = vmatprep.subr.mxu0 0.0
  %59 = vmatpush1.msra.mxu0 0.0
  %60 = vmatprep.subr.mxu0 0.0
  %61 = vmatpush1.msra.mxu0 0.0
  %62 = vmatprep.subr.mxu0 0.0
  %63 = vmatpush1.msra.mxu0 %v22
  %64 = vmatprep.subr.mxu0 0.0
  %65 = vmatpush1.msra.mxu0 %v21
  %66 = vmatprep.subr.mxu0 0.0
  %67 = vmatpush2.msra.mxu0 0.0
  %68 = vmatprep.subr.mxu0 0.0
  %69 = vmatpush2.msra.mxu0 0.0
  %70 = vmatprep.subr.mxu0 0.0
  %71 = vmatpush2.msra.mxu0 0.0
  %72 = vmatprep.subr.mxu0 0.0
  %73 = vmatpush2.msra.mxu0 0.0
  %74 = vmatprep.subr.mxu0 0.0
  %75 = vmatpush2.msra.mxu0 0.0
  %76 = vmatprep.subr.mxu0 0.0
  %77 = vmatpush2.msra.mxu0 0.0
  %78 = vmatprep.subr.mxu0 0.0
  %79 = vmatpush2.msra.mxu0 0.0
  %80 = vmatprep.subr.mxu0 0.0
  %81 = vmatpush2.msra.mxu0 0.0
  %82 = vmatprep.subr.mxu0 0.0
  %83 = vmatpush2.msra.mxu0 0.0
  %84 = vmatprep.subr.mxu0 0.0
  %85 = vmatpush2.msra.mxu0 0.0
  %86 = vmatprep.subr.mxu0 0.0
  %87 = vmatpush2.msra.mxu0 0.0
  %88 = vmatprep.subr.mxu0 0.0
  %89 = vmatpush2.msra.mxu0 0.0
  %90 = vmatprep.subr.mxu0 0.0
  %91 = vmatpush2.msra.mxu0 0.0
  %92 = vmatprep.subr.mxu0 0.0
  %93 = vmatpush2.msra.mxu0 0.0
  %94 = vmatprep.subr.mxu0 0.0
  %95 = vmatpush2.msra.mxu0 0.0
  %96 = vmatprep.subr.mxu0 0.0
  %97 = vmatpush2.msra.mxu0 0.0
  %98 = vmatprep.mubr.f32.mxu0 0.0
  %99 = vmatmul.mubr.f32.gmra.mxu0 %v32
  %v100 = vpop.f32.mrf.mxu0
  %v101 = vadd.f32 %v28, %v100
  %v102 = vpop.f32.mrf.mxu0
  %103 = vdwg.mxu0
  %v104 = vmin.f32 %v101, 0.0
  %v105 = vmul.f32 %v104, 0.5
  %v106 = vtanh.pop %v105
  %v107 = vmul.f32 %v104, 1.442695
  %v108 = vpow.pop %v107
  %v109 = vadd.f32 %v108, 1.0
  %v110 = vmul.f32 %v106, %v109
  %vm111 = vcmp.gt.f32.partialorder %v101, 0.0
  %v112 = vsel %vm111, %v101, %v110
  %v113 = vld [vmem:[%s3] sm:$0xff]
  %v114 = vld [vmem:[%s3 + $0x8] sm:$0xff]
  %v115 = vld [vmem:[%s3 + $0x10] sm:$0xff]
  %v116 = vld [vmem:[%s3 + $0x18] sm:$0xff]
  %v117 = vld [vmem:[%s4] sm:$0x1]
  %v119 = vlaneseq
  %v120 = vshrl.u32 %v119, 7
  %v121 = vsub.s32 0, %v120
  %v122 = vrot.slane %v117, %v121
  %vm124 = vcmask 261120
  %v126 = vsel %vm124, %v112, 0
  %128 = vmatprep.subr.mxu0 0.0
  %129 = vmatpush1.msra.mxu0 0.0
  %130 = vmatprep.subr.mxu0 0.0
  %131 = vmatpush1.msra.mxu0 0.0
  %132 = vmatprep.subr.mxu0 0.0
  %133 = vmatpush1.msra.mxu0 0.0
  %134 = vmatprep.subr.mxu0 0.0
  %135 = vmatpush1.msra.mxu0 0.0
  %136 = vmatprep.subr.mxu0 0.0
  %137 = vmatpush1.msra.mxu0 0.0
  %138 = vmatprep.subr.mxu0 0.0
  %139 = vmatpush1.msra.mxu0 0.0
  %140 = vmatprep.subr.mxu0 0.0
  %141 = vmatpush1.msra.mxu0 0.0
  %142 = vmatprep.subr.mxu0 0.0
  %143 = vmatpush1.msra.mxu0 0.0
  %144 = vmatprep.subr.mxu0 0.0
  %145 = vmatpush1.msra.mxu0 0.0
  %146 = vmatprep.subr.mxu0 0.0
  %147 = vmatpush1.msra.mxu0 0.0
  %148 = vmatprep.subr.mxu0 0.0
  %149 = vmatpush1.msra.mxu0 0.0
  %150 = vmatprep.subr.mxu0 0.0
  %151 = vmatpush1.msra.mxu0 0.0
  %152 = vmatprep.subr.mxu0 0.0
  %153 = vmatpush1.msra.mxu0 %v116
  %154 = vmatprep.subr.mxu0 0.0
  %155 = vmatpush1.msra.mxu0 %v115
  %156 = vmatprep.subr.mxu0 0.0
  %157 = vmatpush1.msra.mxu0 %v114
  %158 = vmatprep.subr.mxu0 0.0
  %159 = vmatpush1.msra.mxu0 %v113
  %160 = vmatprep.subr.mxu0 0.0
  %161 = vmatpush2.msra.mxu0 0.0
  %162 = vmatprep.subr.mxu0 0.0
  %163 = vmatpush2.msra.mxu0 0.0
  %164 = vmatprep.subr.mxu0 0.0
  %165 = vmatpush2.msra.mxu0 0.0
  %166 = vmatprep.subr.mxu0 0.0
  %167 = vmatpush2.msra.mxu0 0.0
  %168 = vmatprep.subr.mxu0 0.0
  %169 = vmatpush2.msra.mxu0 0.0
  %170 = vmatprep.subr.mxu0 0.0
  %171 = vmatpush2.msra.mxu0 0.0
  %172 = vmatprep.subr.mxu0 0.0
  %173 = vmatpush2.msra.mxu0 0.0
  %174 = vmatprep.subr.mxu0 0.0
  %175 = vmatpush2.msra.mxu0 0.0
  %176 = vmatprep.subr.mxu0 0.0
  %177 = vmatpush2.msra.mxu0 0.0
  %178 = vmatprep.subr.mxu0 0.0
  %179 = vmatpush2.msra.mxu0 0.0
  %180 = vmatprep.subr.mxu0 0.0
  %181 = vmatpush2.msra.mxu0 0.0
  %182 = vmatprep.subr.mxu0 0.0
  %183 = vmatpush2.msra.mxu0 0.0
  %184 = vmatprep.subr.mxu0 0.0
  %185 = vmatpush2.msra.mxu0 0.0
  %186 = vmatprep.subr.mxu0 0.0
  %187 = vmatpush2.msra.mxu0 0.0
  %188 = vmatprep.subr.mxu0 0.0
  %189 = vmatpush2.msra.mxu0 0.0
  %190 = vmatprep.subr.mxu0 0.0
  %191 = vmatpush2.msra.mxu0 0.0
  %192 = vmatprep.mubr.f32.mxu0 0.0
  %193 = vmatmul.mubr.f32.gmra.mxu0 %v126
  %v194 = vpop.f32.mrf.mxu0
  %v195 = vadd.f32 %v122, %v194
  %v196 = vpop.f32.mrf.mxu0
  %197 = vdwg.mxu0
  %vm198 = vcmask 31744
  %199 = vst.msk [vmem:[%s5] sm:$0xff] %vm198, %v195
  // Predicated region
  $region22: #{mlp_network_forward.1} parent=0 // pred_check
    _
  $region23: #{mlp_network_forward.1} parent=0 // pred_check_branch
    %201 = sbr.rel (0) target = $region25
  $region24: #{mlp_network_forward.1} parent=0 // pred_region
    _
  $region25: #{mlp_network_forward.1} parent=0 // pred_fallthru
    _
  // Predicated region
  $region26: #{mlp_network_forward.1} parent=0 // pred_check
    _
  $region27: #{mlp_network_forward.1} parent=0 // pred_check_branch
    %203 = sbr.rel (0) target = $region29
  $region28: #{mlp_network_forward.1} parent=0 // pred_region
    _
  $region29: #{mlp_network_forward.1} parent=0 // pred_fallthru
    _

</llo_original>
